<compile_context>
chip_gen: v7x
topology: tpu7x:2x2x1
jax: 0.10.0
libtpu: 0.0.40
codegen_flags: <defaults>
</compile_context>

<pallas_src>
import jax
import jax.numpy as jnp
from jax.experimental import pallas as pl
from jax.experimental.pallas import tpu as pltpu

embedding_dim = 128
hidden_dim = 256
num_class = 2

CPAD = 8          # sublane-padded class dimension (>= num_class, multiple of 8)
TB_MAX = 2048     # max batch rows per grid step


def mlp_kernel(sums_ref, cnt_ref, w1_ref, b1_ref, w2t_ref, b2t_ref, out_ref):
    # EmbeddingBag(mean) finalization: divide per-bag sums by counts (empty bag -> zeros).
    pooled = sums_ref[...] / jnp.maximum(cnt_ref[...], 1.0)                 # (TB, E) f32
    x = pooled.astype(jnp.bfloat16)
    # Linear1 + ReLU: bf16 MXU operands, f32 accumulation and f32 epilogue.
    h = jnp.dot(x, w1_ref[...], preferred_element_type=jnp.float32) + b1_ref[...]
    h = jnp.maximum(h, 0.0)                                                 # (TB, H) f32
    # Linear2, transposed head: (CPAD, H) @ (H, TB) -> (CPAD, TB) so the stored output is
    # narrow (8 sublanes) but lane-dense (TB lanes).
    logits_t = jnp.dot(w2t_ref[...], jnp.transpose(h).astype(jnp.bfloat16),
                       preferred_element_type=jnp.float32) + b2t_ref[...]
    # log_softmax over the (sublane) class axis in f32; padded classes carry a -1e30 bias,
    # so exp underflows to exactly 0 and the first num_class rows are exact log_softmax.
    m = jnp.max(logits_t, axis=0, keepdims=True)
    s = logits_t - m
    lse = jnp.log(jnp.sum(jnp.exp(s), axis=0, keepdims=True))
    out_ref[...] = s - lse


def mlp_forward(inputs, offsets, emb_table, w1, b1, w2, b2):
    """inputs: int32 (T,) token ids; offsets: int32 (B,) sorted bag starts (offsets[0]==0)."""
    T = inputs.shape[0]
    B = offsets.shape[0]
    E = emb_table.shape[1]
    H = w1.shape[1]

    # --- EmbeddingBag(mode='mean') pre-pass: contiguous-bag sums via cumsum + boundary gather
    # (no O(T*B) mask, no scatter-add). NOTE: assumes sorted offsets with offsets[0] == 0
    # (PyTorch EmbeddingBag contract); tokens before offsets[0] would simply be dropped.
    tok_emb = emb_table[inputs].astype(jnp.float32)                          # (T, E) gather
    csum = jnp.concatenate(
        [jnp.zeros((1, E), jnp.float32), jnp.cumsum(tok_emb, axis=0)], axis=0)  # (T+1, E)
    starts = offsets.astype(jnp.int32)
    ends = jnp.concatenate([starts[1:], jnp.array([T], jnp.int32)])

    # --- batch tile: as large as possible, but keep >=2 tiles (v7x megacore) when B allows ---
    b128 = pl.cdiv(B, 128) * 128
    TB = int(min(TB_MAX, max(128, ((b128 // 2) // 128) * 128)))
    B_pad = pl.cdiv(B, TB) * TB

    # padded bags are empty (start == end == T) -> sum 0, count 0 -> pooled 0
    pad = B_pad - B
    starts_p = jnp.concatenate([starts, jnp.full((pad,), T, jnp.int32)])
    ends_p = jnp.concatenate([ends, jnp.full((pad,), T, jnp.int32)])
    sums = csum[ends_p] - csum[starts_p]                                     # (B_pad, E) f32
    counts = (ends_p - starts_p).astype(jnp.float32)[:, None]                # (B_pad, 1) f32

    # --- weights: bf16 MXU operands; transposed, sublane-padded head ---
    w1b = w1.astype(jnp.bfloat16)
    b1b = b1.reshape(1, H).astype(jnp.float32)
    w2t = jnp.zeros((CPAD, H), jnp.bfloat16).at[:num_class, :].set(w2.T.astype(jnp.bfloat16))
    b2t = jnp.full((CPAD, 1), -1e30, jnp.float32).at[:num_class, 0].set(b2.astype(jnp.float32))

    out_t = pl.pallas_call(
        mlp_kernel,
        out_shape=jax.ShapeDtypeStruct((CPAD, B_pad), jnp.float32),
        grid_spec=pltpu.PrefetchScalarGridSpec(
            num_scalar_prefetch=0,
            grid=(B_pad // TB,),
            in_specs=[
                pl.BlockSpec((TB, E), lambda i: (i, 0)),       # bag sums, tiled over batch
                pl.BlockSpec((TB, 1), lambda i: (i, 0)),       # bag counts, tiled over batch
                pl.BlockSpec((E, H), lambda i: (0, 0)),        # w1 resident in VMEM
                pl.BlockSpec((1, H), lambda i: (0, 0)),        # b1 resident
                pl.BlockSpec((CPAD, H), lambda i: (0, 0)),     # w2^T (sublane-padded) resident
                pl.BlockSpec((CPAD, 1), lambda i: (0, 0)),     # b2^T (-1e30-padded) resident
            ],
            out_specs=pl.BlockSpec((CPAD, TB), lambda i: (0, i)),
        ),
        compiler_params=pltpu.CompilerParams(
            dimension_semantics=("parallel",),
            vmem_limit_bytes=32 * 1024 * 1024,   # safe on v7x (64 MiB), above v5e's 16 MiB default
        ),
    )(sums, counts, w1b, b1b, w2t, b2t)

    return out_t[:num_class, :B].T                                            # (B, num_class)


def mlp_reference(inputs, offsets, emb_table, w1, b1, w2, b2):
    """Pure-JAX f32 reference matching the PyTorch forward (independent pooling path)."""
    T = inputs.shape[0]
    B = offsets.shape[0]
    E = emb_table.shape[1]
    seg = jnp.searchsorted(offsets, jnp.arange(T, dtype=jnp.int32), side="right") - 1
    tok_emb = emb_table[inputs]
    sums = jnp.zeros((B, E), jnp.float32).at[seg].add(tok_emb)
    counts = jnp.zeros((B,), jnp.float32).at[seg].add(1.0)
    pooled = sums / jnp.maximum(counts, 1.0)[:, None]
    h = jnp.maximum(pooled @ w1 + b1, 0.0)
    logits = h @ w2 + b2
    return jax.nn.log_softmax(logits, axis=1)


if __name__ == "__main__":
    vocab_size = 100
    batch = 4
    total_tokens = 8

    key = jax.random.PRNGKey(0)
    k_emb, k_w1, k_b1, k_w2, k_b2, k_tok = jax.random.split(key, 6)

    # deterministic synthetic parameters (shapes per nn.Module __init__, weights stored (in, out))
    emb_table = jax.random.normal(k_emb, (vocab_size, embedding_dim), jnp.float32)
    lim1 = 1.0 / jnp.sqrt(embedding_dim)
    w1 = jax.random.uniform(k_w1, (embedding_dim, hidden_dim), jnp.float32, -lim1, lim1)
    b1 = jax.random.uniform(k_b1, (hidden_dim,), jnp.float32, -lim1, lim1)
    lim2 = 1.0 / jnp.sqrt(hidden_dim)
    w2 = jax.random.uniform(k_w2, (hidden_dim, num_class), jnp.float32, -lim2, lim2)
    b2 = jax.random.uniform(k_b2, (num_class,), jnp.float32, -lim2, lim2)

    # deterministic example inputs: 8 token ids split into 4 bags of 2 tokens each
    inputs = jax.random.randint(k_tok, (total_tokens,), 0, vocab_size, jnp.int32)
    offsets = jnp.array([0, 2, 4, 6], dtype=jnp.int32)

    log_probs = mlp_forward(inputs, offsets, emb_table, w1, b1, w2, b2)
    jax.block_until_ready(log_probs)

    assert log_probs.shape == (batch, num_class)
    # log_softmax rows must exp-sum to ~1 (padded classes contribute exactly 0)
    assert jnp.allclose(jnp.sum(jnp.exp(log_probs), axis=1), 1.0, atol=1e-5)
    # cross-check vs f32 reference (loose tolerance: bf16 MXU operands)
    ref = mlp_reference(inputs, offsets, emb_table, w1, b1, w2, b2)
    assert jnp.allclose(log_probs, ref, atol=0.1), (log_probs, ref)
    print("KERNEL_OK")
</pallas_src>

<mosaic_0001>
module attributes {stable_mosaic.version = 11 : i64} {
  func.func @mlp_kernel(%arg0: i32, %arg1: memref<128x128xf32, #tpu.memory_space<vmem>>, %arg2: memref<128x1xf32, #tpu.memory_space<vmem>>, %arg3: memref<128x256xbf16, #tpu.memory_space<vmem>>, %arg4: memref<1x256xf32, #tpu.memory_space<vmem>>, %arg5: memref<8x256xbf16, #tpu.memory_space<vmem>>, %arg6: memref<8x1xf32, #tpu.memory_space<vmem>>, %arg7: memref<8x128xf32, #tpu.memory_space<vmem>>) attributes {dimension_semantics = [#tpu.dimension_semantics<parallel>], iteration_bounds = array<i64: 1>, scalar_prefetch = 0 : i64, scratch_operands = 0 : i64, tpu.core_type = #tpu.core_type<tc>, window_params = [{transform_indices = @transform_0, window_bounds = array<i64: 128, 128>}, {transform_indices = @transform_1, window_bounds = array<i64: 128, 1>}, {pipeline_mode = #tpu.pipeline_mode<synchronous>, transform_indices = @transform_2, window_bounds = array<i64: 128, 256>}, {pipeline_mode = #tpu.pipeline_mode<synchronous>, transform_indices = @transform_3, window_bounds = array<i64: 1, 256>}, {pipeline_mode = #tpu.pipeline_mode<synchronous>, transform_indices = @transform_4, window_bounds = array<i64: 8, 256>}, {pipeline_mode = #tpu.pipeline_mode<synchronous>, transform_indices = @transform_5, window_bounds = array<i64: 8, 1>}, {transform_indices = @transform_6, window_bounds = array<i64: 8, 128>}]} {
    %c0 = arith.constant 0 : index
    %c0_0 = arith.constant 0 : index
    %0 = vector.load %arg1[%c0, %c0_0] : memref<128x128xf32, #tpu.memory_space<vmem>>, vector<128x128xf32>
    %c0_1 = arith.constant 0 : index
    %c0_2 = arith.constant 0 : index
    %1 = vector.load %arg2[%c0_1, %c0_2] : memref<128x1xf32, #tpu.memory_space<vmem>>, vector<128x1xf32>
    %cst = arith.constant 1.000000e+00 : f32
    %2 = vector.broadcast %cst : f32 to vector<128x1xf32>
    %3 = arith.maximumf %1, %2 : vector<128x1xf32>
    %4 = vector.broadcast %3 : vector<128x1xf32> to vector<128x128xf32>
    %5 = arith.divf %0, %4 : vector<128x128xf32>
    %6 = arith.truncf %5 : vector<128x128xf32> to vector<128x128xbf16>
    %c0_3 = arith.constant 0 : index
    %c0_4 = arith.constant 0 : index
    %7 = vector.load %arg3[%c0_3, %c0_4] : memref<128x256xbf16, #tpu.memory_space<vmem>>, vector<128x256xbf16>
    %cst_5 = arith.constant dense<0.000000e+00> : vector<128x256xf32>
    %8 = tpu.matmul %6, %7, %cst_5 {dimension_numbers = #tpu.dot_dimension_numbers<[1], [0], [0], [1], [0, 0, 1, 1], [], []>} : vector<128x128xbf16>, vector<128x256xbf16>, vector<128x256xf32> -> vector<128x256xf32>
    %c0_6 = arith.constant 0 : index
    %c0_7 = arith.constant 0 : index
    %9 = vector.load %arg4[%c0_6, %c0_7] : memref<1x256xf32, #tpu.memory_space<vmem>>, vector<1x256xf32>
    %10 = vector.broadcast %9 : vector<1x256xf32> to vector<128x256xf32>
    %11 = arith.addf %8, %10 : vector<128x256xf32>
    %cst_8 = arith.constant 0.000000e+00 : f32
    %12 = vector.broadcast %cst_8 : f32 to vector<128x256xf32>
    %13 = arith.maximumf %11, %12 : vector<128x256xf32>
    %c0_9 = arith.constant 0 : index
    %c0_10 = arith.constant 0 : index
    %14 = vector.load %arg5[%c0_9, %c0_10] : memref<8x256xbf16, #tpu.memory_space<vmem>>, vector<8x256xbf16>
    %15 = tpu.transpose %13, [1, 0] : vector<128x256xf32> -> vector<256x128xf32>
    %16 = arith.truncf %15 : vector<256x128xf32> to vector<256x128xbf16>
    %cst_11 = arith.constant dense<0.000000e+00> : vector<8x128xf32>
    %17 = tpu.matmul %14, %16, %cst_11 {dimension_numbers = #tpu.dot_dimension_numbers<[1], [0], [0], [1], [0, 0, 1, 1], [], []>} : vector<8x256xbf16>, vector<256x128xbf16>, vector<8x128xf32> -> vector<8x128xf32>
    %c0_12 = arith.constant 0 : index
    %c0_13 = arith.constant 0 : index
    %18 = vector.load %arg6[%c0_12, %c0_13] : memref<8x1xf32, #tpu.memory_space<vmem>>, vector<8x1xf32>
    %19 = vector.broadcast %18 : vector<8x1xf32> to vector<8x128xf32>
    %20 = arith.addf %17, %19 : vector<8x128xf32>
    %cst_14 = arith.constant dense<0xFF800000> : vector<128xf32>
    %21 = vector.multi_reduction <maximumf>, %20, %cst_14 [0] : vector<8x128xf32> to vector<128xf32>
    %22 = vector.shape_cast %21 : vector<128xf32> to vector<1x128xf32>
    %23 = vector.broadcast %22 : vector<1x128xf32> to vector<8x128xf32>
    %24 = arith.subf %20, %23 : vector<8x128xf32>
    %25 = math.exp %24 : vector<8x128xf32>
    %cst_15 = arith.constant dense<0.000000e+00> : vector<128xf32>
    %26 = vector.multi_reduction <add>, %25, %cst_15 [0] : vector<8x128xf32> to vector<128xf32>
    %27 = vector.shape_cast %26 : vector<128xf32> to vector<1x128xf32>
    %28 = math.log %27 : vector<1x128xf32>
    %29 = vector.broadcast %28 : vector<1x128xf32> to vector<8x128xf32>
    %30 = arith.subf %24, %29 : vector<8x128xf32>
    %c0_16 = arith.constant 0 : index
    %c0_17 = arith.constant 0 : index
    %31 = vector.load %arg7[%c0_16, %c0_17] : memref<8x128xf32, #tpu.memory_space<vmem>>, vector<8x128xf32>
    tpu.vector_store %arg7[%c0_16, %c0_17], %30 {strides = array<i32>} : memref<8x128xf32, #tpu.memory_space<vmem>>, vector<8x128xf32>,
    return
  }
  func.func @transform_0(%arg0: i32) -> (i32, i32) {
    %c0_i32 = arith.constant 0 : i32
    %c0_i32_0 = arith.constant 0 : i32
    return %arg0, %c0_i32 : i32, i32
  }
  func.func @transform_1(%arg0: i32) -> (i32, i32) {
    %c0_i32 = arith.constant 0 : i32
    %c0_i32_0 = arith.constant 0 : i32
    return %arg0, %c0_i32 : i32, i32
  }
  func.func @transform_2(%arg0: i32) -> (i32, i32) {
    %c0_i32 = arith.constant 0 : i32
    %c0_i32_0 = arith.constant 0 : i32
    %c0_i32_1 = arith.constant 0 : i32
    return %c0_i32, %c0_i32_0 : i32, i32
  }
  func.func @transform_3(%arg0: i32) -> (i32, i32) {
    %c0_i32 = arith.constant 0 : i32
    %c0_i32_0 = arith.constant 0 : i32
    %c0_i32_1 = arith.constant 0 : i32
    return %c0_i32, %c0_i32_0 : i32, i32
  }
  func.func @transform_4(%arg0: i32) -> (i32, i32) {
    %c0_i32 = arith.constant 0 : i32
    %c0_i32_0 = arith.constant 0 : i32
    %c0_i32_1 = arith.constant 0 : i32
    return %c0_i32, %c0_i32_0 : i32, i32
  }
  func.func @transform_5(%arg0: i32) -> (i32, i32) {
    %c0_i32 = arith.constant 0 : i32
    %c0_i32_0 = arith.constant 0 : i32
    %c0_i32_1 = arith.constant 0 : i32
    return %c0_i32, %c0_i32_0 : i32, i32
  }
  func.func @transform_6(%arg0: i32) -> (i32, i32) {
    %c0_i32 = arith.constant 0 : i32
    %c0_i32_0 = arith.constant 0 : i32
    return %c0_i32, %arg0 : i32, i32
  }
}

</mosaic_0001>

<llo_original>
// kernel: tpu_custom_call.1
$region0: #{tpu_custom_call.1}
  #allocation0 [shape = 'u32[]', space=smem, size = 0x4, offset = 0x4, fixed_abs, tag = 'smem constant byte address 0x4 - core index']
  #allocation1 [shape = 'u32[144,128]{1,0:T(1,128)}', space=vmem, size = 0x12000, scoped, tag = 'internal scratch']
  %s0 = inlined_call_operand.vmem [shape: f32[128,128], index: 0, kind: input, shape index: {}]
  %s1 = inlined_call_operand.vmem [shape: f32[128,1], index: 1, kind: input, shape index: {}]
  %s2 = inlined_call_operand.hbm [shape: bf16[128,256], index: 2, kind: input, shape index: {}]
  %s3 = inlined_call_operand.vmem [shape: f32[1,256], index: 3, kind: input, shape index: {}]
  %s4 = inlined_call_operand.vmem [shape: bf16[8,256], index: 4, kind: input, shape index: {}]
  %s5 = inlined_call_operand.vmem [shape: f32[8,1], index: 5, kind: input, shape index: {}]
  %s6 = inlined_call_operand.hbm [shape: f32[8,128], index: 6, kind: output, shape index: {}]
  %s7 = sld [smem:[#allocation0]]
  $region38: #{tpu_custom_call.1} parent=0
    _
  %s9 = ssub.s32 1, %s7
  %s10 = scalar_select 0, %s9, %s7
  $region1: #{tpu_custom_call.1} parent=0
    #allocation2 [shape = 'u8[65536]{0}', space=vmem, size = 0x10000, scoped, tag = 'input window, operand 2, single buffered']
    #allocation3 [shape = 's32[1]{0}', space=sflag, size = 0x4, scoped, tag = 'scoped memory for tpu_custom_call.1']
    #allocation4 [shape = 's32[1]{0}', space=sflag, size = 0x4, scoped, tag = 'scoped memory for tpu_custom_call.1']
    #allocation5 [shape = 'u8[4096]{0}', space=vmem, size = 0x1000, scoped, tag = 'output window, operand 0, single buffered']
    %11 = vsyncpa [#allocation3], 0
    %12 = vsyncpa [#allocation4], 0
    // Predicated region
    $region2: #{tpu_custom_call.1} parent=1 // pred_check
      _
    $region3: #{tpu_custom_call.1} parent=1 // pred_check_branch
      %14 = sbr.rel (0) target = $region5
    $region4: #{tpu_custom_call.1} parent=1 // pred_region
      _
    $region5: #{tpu_custom_call.1} parent=1 // pred_fallthru
      _
    // Predicated region
    $region6: #{tpu_custom_call.1} parent=1 // pred_check
      _
    $region7: #{tpu_custom_call.1} parent=1 // pred_check_branch
      %16 = sbr.rel (0) target = $region9
    $region8: #{tpu_custom_call.1} parent=1 // pred_region
      _
    $region9: #{tpu_custom_call.1} parent=1 // pred_fallthru
      _
    // Predicated region
    $region10: #{tpu_custom_call.1} parent=1 // pred_check
      _
    $region11: #{tpu_custom_call.1} parent=1 // pred_check_branch
      %18 = sbr.rel (0) target = $region13
    $region12: #{tpu_custom_call.1} parent=1 // pred_region
      %s20 = ssub.s32 2048, 2048
      %21 = vsyncadd [#allocation3], %s20
      %s22 = sshll.u32 [#allocation2], 4
      %s23 = int_to_ptr.vmem [resolvable:$true] %s22
      %28 = dma.hbm_to_vmem [thread:$0]  %s2, 2048, %s23, [#allocation3], 128, 128, 8
    $region13: #{tpu_custom_call.1} parent=1 // pred_fallthru
      _
    // Predicated region
    $region14: #{tpu_custom_call.1} parent=1 // pred_check
      _
    $region15: #{tpu_custom_call.1} parent=1 // pred_check_branch
      %30 = sbr.rel (0) target = $region17
    $region16: #{tpu_custom_call.1} parent=1 // pred_region
      _
    $region17: #{tpu_custom_call.1} parent=1 // pred_fallthru
      _
    // Predicated region
    $region18: #{tpu_custom_call.1} parent=1 // pred_check
      _
    $region19: #{tpu_custom_call.1} parent=1 // pred_check_branch
      %32 = sbr.rel (0) target = $region21
    $region20: #{tpu_custom_call.1} parent=1 // pred_region
      _
    $region21: #{tpu_custom_call.1} parent=1 // pred_fallthru
      _
    // Predicated region
    $region22: #{tpu_custom_call.1} parent=1 // pred_check
      _
    $region23: #{tpu_custom_call.1} parent=1 // pred_check_branch
      %34 = sbr.rel (0) target = $region25
    $region24: #{tpu_custom_call.1} parent=1 // pred_region
      _
    $region25: #{tpu_custom_call.1} parent=1 // pred_fallthru
      _
    // Predicated region
    $region26: #{tpu_custom_call.1} parent=1 // pred_check
      _
    $region27: #{tpu_custom_call.1} parent=1 // pred_check_branch
      %36 = sbr.rel (0) target = $region29
    $region28: #{tpu_custom_call.1} parent=1 // pred_region
      %37 = dma.done [#allocation3], 2048
    $region29: #{tpu_custom_call.1} parent=1 // pred_fallthru
      _
    %v39 = vld [vmem:[%s0] sm:$0xff]
    %v40 = vld [vmem:[%s0 + $0x8] sm:$0xff]
    %v41 = vld [vmem:[%s0 + $0x10] sm:$0xff]
    %v42 = vld [vmem:[%s0 + $0x18] sm:$0xff]
    %v43 = vld [vmem:[%s0 + $0x20] sm:$0xff]
    %v44 = vld [vmem:[%s0 + $0x28] sm:$0xff]
    %v45 = vld [vmem:[%s0 + $0x30] sm:$0xff]
    %v46 = vld [vmem:[%s0 + $0x38] sm:$0xff]
    %v47 = vld [vmem:[%s0 + $0x40] sm:$0xff]
    %v48 = vld [vmem:[%s0 + $0x48] sm:$0xff]
    %v49 = vld [vmem:[%s0 + $0x50] sm:$0xff]
    %v50 = vld [vmem:[%s0 + $0x58] sm:$0xff]
    %v51 = vld [vmem:[%s0 + $0x60] sm:$0xff]
    %v52 = vld [vmem:[%s0 + $0x68] sm:$0xff]
    %v53 = vld [vmem:[%s0 + $0x70] sm:$0xff]
    %v54 = vld [vmem:[%s0 + $0x78] sm:$0xff]
    %v55 = vld [vmem:[%s1] sm:$0xff]
    %v56 = vld [vmem:[%s1 + $0x8] sm:$0xff]
    %v57 = vld [vmem:[%s1 + $0x10] sm:$0xff]
    %v58 = vld [vmem:[%s1 + $0x18] sm:$0xff]
    %v59 = vld [vmem:[%s1 + $0x20] sm:$0xff]
    %v60 = vld [vmem:[%s1 + $0x28] sm:$0xff]
    %v61 = vld [vmem:[%s1 + $0x30] sm:$0xff]
    %v62 = vld [vmem:[%s1 + $0x38] sm:$0xff]
    %v63 = vld [vmem:[%s1 + $0x40] sm:$0xff]
    %v64 = vld [vmem:[%s1 + $0x48] sm:$0xff]
    %v65 = vld [vmem:[%s1 + $0x50] sm:$0xff]
    %v66 = vld [vmem:[%s1 + $0x58] sm:$0xff]
    %v67 = vld [vmem:[%s1 + $0x60] sm:$0xff]
    %v68 = vld [vmem:[%s1 + $0x68] sm:$0xff]
    %v69 = vld [vmem:[%s1 + $0x70] sm:$0xff]
    %v70 = vld [vmem:[%s1 + $0x78] sm:$0xff]
    %v71 = vmax.f32 %v55, 1.0
    %v72 = vmax.f32 %v56, 1.0
    %v73 = vmax.f32 %v57, 1.0
    %v74 = vmax.f32 %v58, 1.0
    %v75 = vmax.f32 %v59, 1.0
    %v76 = vmax.f32 %v60, 1.0
    %v77 = vmax.f32 %v61, 1.0
    %v78 = vmax.f32 %v62, 1.0
    %v79 = vmax.f32 %v63, 1.0
    %v80 = vmax.f32 %v64, 1.0
    %v81 = vmax.f32 %v65, 1.0
    %v82 = vmax.f32 %v66, 1.0
    %v83 = vmax.f32 %v67, 1.0
    %v84 = vmax.f32 %v68, 1.0
    %v85 = vmax.f32 %v69, 1.0
    %v86 = vmax.f32 %v70, 1.0
    %88 = vset.pattern.permute.xlu0 0
    %89 = vperm.xlu0 %88, %v71
    %v90 = vpop.permute.xlu0 %89
    %93 = vset.pattern.permute.xlu0 0
    %94 = vperm.xlu0 %93, %v72
    %v95 = vpop.permute.xlu0 %94
    %98 = vset.pattern.permute.xlu0 0
    %99 = vperm.xlu0 %98, %v73
    %v100 = vpop.permute.xlu0 %99
    %103 = vset.pattern.permute.xlu0 0
    %104 = vperm.xlu0 %103, %v74
    %v105 = vpop.permute.xlu0 %104
    %108 = vset.pattern.permute.xlu0 0
    %109 = vperm.xlu0 %108, %v75
    %v110 = vpop.permute.xlu0 %109
    %113 = vset.pattern.permute.xlu0 0
    %114 = vperm.xlu0 %113, %v76
    %v115 = vpop.permute.xlu0 %114
    %118 = vset.pattern.permute.xlu0 0
    %119 = vperm.xlu0 %118, %v77
    %v120 = vpop.permute.xlu0 %119
    %123 = vset.pattern.permute.xlu0 0
    %124 = vperm.xlu0 %123, %v78
    %v125 = vpop.permute.xlu0 %124
    %128 = vset.pattern.permute.xlu0 0
    %129 = vperm.xlu0 %128, %v79
    %v130 = vpop.permute.xlu0 %129
    %133 = vset.pattern.permute.xlu0 0
    %134 = vperm.xlu0 %133, %v80
    %v135 = vpop.permute.xlu0 %134
    %138 = vset.pattern.permute.xlu0 0
    %139 = vperm.xlu0 %138, %v81
    %v140 = vpop.permute.xlu0 %139
    %143 = vset.pattern.permute.xlu0 0
    %144 = vperm.xlu0 %143, %v82
    %v145 = vpop.permute.xlu0 %144
    %148 = vset.pattern.permute.xlu0 0
    %149 = vperm.xlu0 %148, %v83
    %v150 = vpop.permute.xlu0 %149
    %153 = vset.pattern.permute.xlu0 0
    %154 = vperm.xlu0 %153, %v84
    %v155 = vpop.permute.xlu0 %154
    %158 = vset.pattern.permute.xlu0 0
    %159 = vperm.xlu0 %158, %v85
    %v160 = vpop.permute.xlu0 %159
    %163 = vset.pattern.permute.xlu0 0
    %164 = vperm.xlu0 %163, %v86
    %v165 = vpop.permute.xlu0 %164
    %v167 = vrcp.pop %v90
    %v168 = vmul.f32 %v39, %v167
    %v169 = vrcp.pop %v95
    %v170 = vmul.f32 %v40, %v169
    %v171 = vrcp.pop %v100
    %v172 = vmul.f32 %v41, %v171
    %v173 = vrcp.pop %v105
    %v174 = vmul.f32 %v42, %v173
    %v175 = vrcp.pop %v110
    %v176 = vmul.f32 %v43, %v175
    %v177 = vrcp.pop %v115
    %v178 = vmul.f32 %v44, %v177
    %v179 = vrcp.pop %v120
    %v180 = vmul.f32 %v45, %v179
    %v181 = vrcp.pop %v125
    %v182 = vmul.f32 %v46, %v181
    %v183 = vrcp.pop %v130
    %v184 = vmul.f32 %v47, %v183
    %v185 = vrcp.pop %v135
    %v186 = vmul.f32 %v48, %v185
    %v187 = vrcp.pop %v140
    %v188 = vmul.f32 %v49, %v187
    %v189 = vrcp.pop %v145
    %v190 = vmul.f32 %v50, %v189
    %v191 = vrcp.pop %v150
    %v192 = vmul.f32 %v51, %v191
    %v193 = vrcp.pop %v155
    %v194 = vmul.f32 %v52, %v193
    %v195 = vrcp.pop %v160
    %v196 = vmul.f32 %v53, %v195
    %v197 = vrcp.pop %v165
    %v198 = vmul.f32 %v54, %v197
    %v199 = vpack.c.bf16 %v170, %v168
    %v200 = vpack.c.bf16 %v174, %v172
    %v201 = vpack.c.bf16 %v178, %v176
    %v202 = vpack.c.bf16 %v182, %v180
    %v203 = vpack.c.bf16 %v186, %v184
    %v204 = vpack.c.bf16 %v190, %v188
    %v205 = vpack.c.bf16 %v194, %v192
    %v206 = vpack.c.bf16 %v198, %v196
    %v207 = vld [vmem:[#allocation2] sm:$0xff]
    %v208 = vld [vmem:[#allocation2 + $0x8] sm:$0xff]
    %v209 = vld [vmem:[#allocation2 + $0x10] sm:$0xff]
    %v210 = vld [vmem:[#allocation2 + $0x18] sm:$0xff]
    %v211 = vld [vmem:[#allocation2 + $0x20] sm:$0xff]
    %v212 = vld [vmem:[#allocation2 + $0x28] sm:$0xff]
    %v213 = vld [vmem:[#allocation2 + $0x30] sm:$0xff]
    %v214 = vld [vmem:[#allocation2 + $0x38] sm:$0xff]
    %v215 = vld [vmem:[#allocation2 + $0x40] sm:$0xff]
    %v216 = vld [vmem:[#allocation2 + $0x48] sm:$0xff]
    %v217 = vld [vmem:[#allocation2 + $0x50] sm:$0xff]
    %v218 = vld [vmem:[#allocation2 + $0x58] sm:$0xff]
    %v219 = vld [vmem:[#allocation2 + $0x60] sm:$0xff]
    %v220 = vld [vmem:[#allocation2 + $0x68] sm:$0xff]
    %v221 = vld [vmem:[#allocation2 + $0x70] sm:$0xff]
    %v222 = vld [vmem:[#allocation2 + $0x78] sm:$0xff]
    %v223 = vld [vmem:[%s3] sm:$0x3]
    %v225 = vlaneseq
    %v226 = vshrl.u32 %v225, 7
    %v227 = vsub.s32 0, %v226
    %v228 = vrot.slane %v223, %v227
    %v229 = vlaneseq
    %v230 = vshrl.u32 %v229, 7
    %v231 = vsub.s32 1, %v230
    %v232 = vrot.slane %v223, %v231
    %v251 = vunpack.c.l.b16 %v207
    %v252 = vunpack.c.h.b16 %v207
    %v253 = vunpack.c.l.b16 %v208
    %v254 = vunpack.c.h.b16 %v208
    %v255 = vunpack.c.l.b16 %v209
    %v256 = vunpack.c.h.b16 %v209
    %v257 = vunpack.c.l.b16 %v210
    %v258 = vunpack.c.h.b16 %v210
    %v259 = vunpack.c.l.b16 %v211
    %v260 = vunpack.c.h.b16 %v211
    %v261 = vunpack.c.l.b16 %v212
    %v262 = vunpack.c.h.b16 %v212
    %v263 = vunpack.c.l.b16 %v213
    %v264 = vunpack.c.h.b16 %v213
    %v265 = vunpack.c.l.b16 %v214
    %v266 = vunpack.c.h.b16 %v214
    %v267 = vunpack.c.l.b16 %v215
    %v268 = vunpack.c.h.b16 %v215
    %v269 = vunpack.c.l.b16 %v216
    %v270 = vunpack.c.h.b16 %v216
    %v271 = vunpack.c.l.b16 %v217
    %v272 = vunpack.c.h.b16 %v217
    %v273 = vunpack.c.l.b16 %v218
    %v274 = vunpack.c.h.b16 %v218
    %v275 = vunpack.c.l.b16 %v219
    %v276 = vunpack.c.h.b16 %v219
    %v277 = vunpack.c.l.b16 %v220
    %v278 = vunpack.c.h.b16 %v220
    %v279 = vunpack.c.l.b16 %v221
    %v280 = vunpack.c.h.b16 %v221
    %v281 = vunpack.c.l.b16 %v222
    %v282 = vunpack.c.h.b16 %v222
    %v283 = vpack.c.b16 %v253, %v251
    %v284 = vpack.c.b16 %v254, %v252
    %v285 = vpack.c.b16 %v257, %v255
    %v286 = vpack.c.b16 %v258, %v256
    %v287 = vpack.c.b16 %v261, %v259
    %v288 = vpack.c.b16 %v262, %v260
    %v289 = vpack.c.b16 %v265, %v263
    %v290 = vpack.c.b16 %v266, %v264
    %v291 = vpack.c.b16 %v269, %v267
    %v292 = vpack.c.b16 %v270, %v268
    %v293 = vpack.c.b16 %v273, %v271
    %v294 = vpack.c.b16 %v274, %v272
    %v295 = vpack.c.b16 %v277, %v275
    %v296 = vpack.c.b16 %v278, %v276
    %v297 = vpack.c.b16 %v281, %v279
    %v298 = vpack.c.b16 %v282, %v280
    %315 = vmatprep.subr.bf16.mxu0 %v284
    %316 = vmatpush1.bf16.msra.mxu0 %v283
    %317 = vmatprep.subr.bf16.mxu0 %v286
    %318 = vmatpush1.bf16.msra.mxu0 %v285
    %319 = vmatprep.subr.bf16.mxu0 %v288
    %320 = vmatpush1.bf16.msra.mxu0 %v287
    %321 = vmatprep.subr.bf16.mxu0 %v290
    %322 = vmatpush1.bf16.msra.mxu0 %v289
    %323 = vmatprep.subr.bf16.mxu0 %v292
    %324 = vmatpush1.bf16.msra.mxu0 %v291
    %325 = vmatprep.subr.bf16.mxu0 %v294
    %326 = vmatpush1.bf16.msra.mxu0 %v293
    %327 = vmatprep.subr.bf16.mxu0 %v296
    %328 = vmatpush1.bf16.msra.mxu0 %v295
    %329 = vmatprep.subr.bf16.mxu0 %v298
    %330 = vmatpush1.bf16.msra.mxu0 %v297
    %331 = vmatprep.subr.bf16.mxu0 0
    %332 = vmatpush1.bf16.msra.mxu0 0
    %333 = vmatprep.subr.bf16.mxu0 0
    %334 = vmatpush1.bf16.msra.mxu0 0
    %335 = vmatprep.subr.bf16.mxu0 0
    %336 = vmatpush1.bf16.msra.mxu0 0
    %337 = vmatprep.subr.bf16.mxu0 0
    %338 = vmatpush1.bf16.msra.mxu0 0
    %339 = vmatprep.subr.bf16.mxu0 0
    %340 = vmatpush1.bf16.msra.mxu0 0
    %341 = vmatprep.subr.bf16.mxu0 0
    %342 = vmatpush1.bf16.msra.mxu0 0
    %343 = vmatprep.subr.bf16.mxu0 0
    %344 = vmatpush1.bf16.msra.mxu0 0
    %345 = vmatprep.subr.bf16.mxu0 0
    %346 = vmatpush1.bf16.msra.mxu0 0
    %347 = vmatprep.mubr.bf16.mxu0 0
    %348 = vmatmul.mubr.bf16.gmra.mrb[0].mxu0 %v199
    %v349 = vpop.f32.mrb[0].mxu0
    %v350 = vadd.f32 %v228, %v349
    %v351 = vpop.f32.mrb[0].mxu0
    %v352 = vadd.f32 %v232, %v351
    %v353 = vpop.f32.mrb[0].mxu0
    %v354 = vadd.f32 %v228, %v353
    %v355 = vpop.f32.mrb[0].mxu0
    %v356 = vadd.f32 %v232, %v355
    %357 = vmatprep.mubr.bf16.mxu0 0
    %358 = vmatmul.mubr.bf16.gmra.mrb[0].mxu0 %v200
    %v359 = vpop.f32.mrb[0].mxu0
    %v360 = vadd.f32 %v228, %v359
    %v361 = vpop.f32.mrb[0].mxu0
    %v362 = vadd.f32 %v232, %v361
    %v363 = vpop.f32.mrb[0].mxu0
    %v364 = vadd.f32 %v228, %v363
    %v365 = vpop.f32.mrb[0].mxu0
    %v366 = vadd.f32 %v232, %v365
    %367 = vmatprep.mubr.bf16.mxu0 0
    %368 = vmatmul.mubr.bf16.gmra.mrb[0].mxu0 %v201
    %v369 = vpop.f32.mrb[0].mxu0
    %v370 = vadd.f32 %v228, %v369
    %v371 = vpop.f32.mrb[0].mxu0
    %v372 = vadd.f32 %v232, %v371
    %v373 = vpop.f32.mrb[0].mxu0
    %v374 = vadd.f32 %v228, %v373
    %v375 = vpop.f32.mrb[0].mxu0
    %v376 = vadd.f32 %v232, %v375
    %377 = vmatprep.mubr.bf16.mxu0 0
    %378 = vmatmul.mubr.bf16.gmra.mrb[0].mxu0 %v202
    %v379 = vpop.f32.mrb[0].mxu0
    %v380 = vadd.f32 %v228, %v379
    %v381 = vpop.f32.mrb[0].mxu0
    %v382 = vadd.f32 %v232, %v381
    %v383 = vpop.f32.mrb[0].mxu0
    %v384 = vadd.f32 %v228, %v383
    %v385 = vpop.f32.mrb[0].mxu0
    %v386 = vadd.f32 %v232, %v385
    %387 = vmatprep.mubr.bf16.mxu0 0
    %388 = vmatmul.mubr.bf16.gmra.mrb[0].mxu0 %v203
    %v389 = vpop.f32.mrb[0].mxu0
    %v390 = vadd.f32 %v228, %v389
    %v391 = vpop.f32.mrb[0].mxu0
    %v392 = vadd.f32 %v232, %v391
    %v393 = vpop.f32.mrb[0].mxu0
    %v394 = vadd.f32 %v228, %v393
    %v395 = vpop.f32.mrb[0].mxu0
    %v396 = vadd.f32 %v232, %v395
    %397 = vmatprep.mubr.bf16.mxu0 0
    %398 = vmatmul.mubr.bf16.gmra.mrb[0].mxu0 %v204
    %v399 = vpop.f32.mrb[0].mxu0
    %v400 = vadd.f32 %v228, %v399
    %v401 = vpop.f32.mrb[0].mxu0
    %v402 = vadd.f32 %v232, %v401
    %v403 = vpop.f32.mrb[0].mxu0
    %v404 = vadd.f32 %v228, %v403
    %v405 = vpop.f32.mrb[0].mxu0
    %v406 = vadd.f32 %v232, %v405
    %407 = vmatprep.mubr.bf16.mxu0 0
    %408 = vmatmul.mubr.bf16.gmra.mrb[0].mxu0 %v205
    %v409 = vpop.f32.mrb[0].mxu0
    %v410 = vadd.f32 %v228, %v409
    %v411 = vpop.f32.mrb[0].mxu0
    %v412 = vadd.f32 %v232, %v411
    %v413 = vpop.f32.mrb[0].mxu0
    %v414 = vadd.f32 %v228, %v413
    %v415 = vpop.f32.mrb[0].mxu0
    %v416 = vadd.f32 %v232, %v415
    %417 = vmatprep.mubr.bf16.mxu0 0
    %418 = vmatmul.mubr.bf16.gmra.mrb[0].mxu0 %v206
    %v419 = vpop.f32.mrb[0].mxu0
    %v420 = vadd.f32 %v228, %v419
    %v421 = vpop.f32.mrb[0].mxu0
    %v422 = vadd.f32 %v232, %v421
    %v423 = vpop.f32.mrb[0].mxu0
    %v424 = vadd.f32 %v228, %v423
    %v425 = vpop.f32.mrb[0].mxu0
    %v426 = vadd.f32 %v232, %v425
    %427 = vdwg.mxu0
    %v428 = vmax.f32 %v350, 0.0
    %v429 = vmax.f32 %v352, 0.0
    %v430 = vmax.f32 %v354, 0.0
    %v431 = vmax.f32 %v356, 0.0
    %v432 = vmax.f32 %v360, 0.0
    %v433 = vmax.f32 %v362, 0.0
    %v434 = vmax.f32 %v364, 0.0
    %v435 = vmax.f32 %v366, 0.0
    %v436 = vmax.f32 %v370, 0.0
    %v437 = vmax.f32 %v372, 0.0
    %v438 = vmax.f32 %v374, 0.0
    %v439 = vmax.f32 %v376, 0.0
    %v440 = vmax.f32 %v380, 0.0
    %v441 = vmax.f32 %v382, 0.0
    %v442 = vmax.f32 %v384, 0.0
    %v443 = vmax.f32 %v386, 0.0
    %v444 = vmax.f32 %v390, 0.0
    %v445 = vmax.f32 %v392, 0.0
    %v446 = vmax.f32 %v394, 0.0
    %v447 = vmax.f32 %v396, 0.0
    %v448 = vmax.f32 %v400, 0.0
    %v449 = vmax.f32 %v402, 0.0
    %v450 = vmax.f32 %v404, 0.0
    %v451 = vmax.f32 %v406, 0.0
    %v452 = vmax.f32 %v410, 0.0
    %v453 = vmax.f32 %v412, 0.0
    %v454 = vmax.f32 %v414, 0.0
    %v455 = vmax.f32 %v416, 0.0
    %v456 = vmax.f32 %v420, 0.0
    %v457 = vmax.f32 %v422, 0.0
    %v458 = vmax.f32 %v424, 0.0
    %v459 = vmax.f32 %v426, 0.0
    %v460 = vld [vmem:[%s4] sm:$0xff]
    %461 = vxpose.xlu0.b32.start [1/16] %v428, 128
    %462 = vxpose.xlu0.b32.cont [2/16] %v430, 128
    %463 = vxpose.xlu0.b32.cont [3/16] %v432, 128
    %464 = vxpose.xlu0.b32.cont [4/16] %v434, 128
    %465 = vxpose.xlu0.b32.cont [5/16] %v436, 128
    %466 = vxpose.xlu0.b32.cont [6/16] %v438, 128
    %467 = vxpose.xlu0.b32.cont [7/16] %v440, 128
    %468 = vxpose.xlu0.b32.cont [8/16] %v442, 128
    %469 = vxpose.xlu0.b32.cont [9/16] %v444, 128
    %470 = vxpose.xlu0.b32.cont [10/16] %v446, 128
    %471 = vxpose.xlu0.b32.cont [11/16] %v448, 128
    %472 = vxpose.xlu0.b32.cont [12/16] %v450, 128
    %473 = vxpose.xlu0.b32.cont [13/16] %v452, 128
    %474 = vxpose.xlu0.b32.cont [14/16] %v454, 128
    %475 = vxpose.xlu0.b32.cont [15/16] %v456, 128
    %476 = vxpose.xlu0.b32.end [16/16] %v458, 128
    %v477 = vpop.trf.xlu0
    %v478 = vpop.trf.xlu0
    %v479 = vpop.trf.xlu0
    %v480 = vpop.trf.xlu0
    %v481 = vpop.trf.xlu0
    %v482 = vpop.trf.xlu0
    %v483 = vpop.trf.xlu0
    %v484 = vpop.trf.xlu0
    %v485 = vpop.trf.xlu0
    %v486 = vpop.trf.xlu0
    %v487 = vpop.trf.xlu0
    %v488 = vpop.trf.xlu0
    %v489 = vpop.trf.xlu0
    %v490 = vpop.trf.xlu0
    %v491 = vpop.trf.xlu0
    %v492 = vpop.trf.xlu0
    %493 = vxpose.xlu0.b32.start [1/16] %v429, 128
    %494 = vxpose.xlu0.b32.cont [2/16] %v431, 128
    %495 = vxpose.xlu0.b32.cont [3/16] %v433, 128
    %496 = vxpose.xlu0.b32.cont [4/16] %v435, 128
    %497 = vxpose.xlu0.b32.cont [5/16] %v437, 128
    %498 = vxpose.xlu0.b32.cont [6/16] %v439, 128
    %499 = vxpose.xlu0.b32.cont [7/16] %v441, 128
    %500 = vxpose.xlu0.b32.cont [8/16] %v443, 128
    %501 = vxpose.xlu0.b32.cont [9/16] %v445, 128
    %502 = vxpose.xlu0.b32.cont [10/16] %v447, 128
    %503 = vxpose.xlu0.b32.cont [11/16] %v449, 128
    %504 = vxpose.xlu0.b32.cont [12/16] %v451, 128
    %505 = vxpose.xlu0.b32.cont [13/16] %v453, 128
    %506 = vxpose.xlu0.b32.cont [14/16] %v455, 128
    %507 = vxpose.xlu0.b32.cont [15/16] %v457, 128
    %508 = vxpose.xlu0.b32.end [16/16] %v459, 128
    %v509 = vpop.trf.xlu0
    %v510 = vpop.trf.xlu0
    %v511 = vpop.trf.xlu0
    %v512 = vpop.trf.xlu0
    %v513 = vpop.trf.xlu0
    %v514 = vpop.trf.xlu0
    %v515 = vpop.trf.xlu0
    %v516 = vpop.trf.xlu0
    %v517 = vpop.trf.xlu0
    %v518 = vpop.trf.xlu0
    %v519 = vpop.trf.xlu0
    %v520 = vpop.trf.xlu0
    %v521 = vpop.trf.xlu0
    %v522 = vpop.trf.xlu0
    %v523 = vpop.trf.xlu0
    %v524 = vpop.trf.xlu0
    %v525 = vpack.c.bf16 %v478, %v477
    %v526 = vpack.c.bf16 %v480, %v479
    %v527 = vpack.c.bf16 %v482, %v481
    %v528 = vpack.c.bf16 %v484, %v483
    %v529 = vpack.c.bf16 %v486, %v485
    %v530 = vpack.c.bf16 %v488, %v487
    %v531 = vpack.c.bf16 %v490, %v489
    %v532 = vpack.c.bf16 %v492, %v491
    %v533 = vpack.c.bf16 %v510, %v509
    %v534 = vpack.c.bf16 %v512, %v511
    %v535 = vpack.c.bf16 %v514, %v513
    %v536 = vpack.c.bf16 %v516, %v515
    %v537 = vpack.c.bf16 %v518, %v517
    %v538 = vpack.c.bf16 %v520, %v519
    %v539 = vpack.c.bf16 %v522, %v521
    %v540 = vpack.c.bf16 %v524, %v523
    %v541 = vld [vmem:[%s5] sm:$0xff]
    %543 = vset.pattern.permute.xlu0 0
    %544 = vperm.xlu0 %543, %v541
    %v545 = vpop.permute.xlu0 %544
    %v548 = vunpack.c.l.b16 %v460
    %v549 = vunpack.c.h.b16 %v460
    %v550 = vpack.c.b16 %v548, %v548
    %v551 = vpack.c.b16 %v549, %v549
    %554 = vmatprep.subr.bf16.mxu0 0
    %555 = vmatpush1.bf16.msra.mxu0 %v525
    %556 = vmatprep.subr.bf16.mxu0 0
    %557 = vmatpush1.bf16.msra.mxu0 %v526
    %558 = vmatprep.subr.bf16.mxu0 0
    %559 = vmatpush1.bf16.msra.mxu0 %v527
    %560 = vmatprep.subr.bf16.mxu0 0
    %561 = vmatpush1.bf16.msra.mxu0 %v528
    %562 = vmatprep.subr.bf16.mxu0 0
    %563 = vmatpush1.bf16.msra.mxu0 %v529
    %564 = vmatprep.subr.bf16.mxu0 0
    %565 = vmatpush1.bf16.msra.mxu0 %v530
    %566 = vmatprep.subr.bf16.mxu0 0
    %567 = vmatpush1.bf16.msra.mxu0 %v531
    %568 = vmatprep.subr.bf16.mxu0 0
    %569 = vmatpush1.bf16.msra.mxu0 %v532
    %570 = vmatprep.subr.bf16.mxu0 0
    %571 = vmatpush1.bf16.msra.mxu0 %v533
    %572 = vmatprep.subr.bf16.mxu0 0
    %573 = vmatpush1.bf16.msra.mxu0 %v534
    %574 = vmatprep.subr.bf16.mxu0 0
    %575 = vmatpush1.bf16.msra.mxu0 %v535
    %576 = vmatprep.subr.bf16.mxu0 0
    %577 = vmatpush1.bf16.msra.mxu0 %v536
    %578 = vmatprep.subr.bf16.mxu0 0
    %579 = vmatpush1.bf16.msra.mxu0 %v537
    %580 = vmatprep.subr.bf16.mxu0 0
    %581 = vmatpush1.bf16.msra.mxu0 %v538
    %582 = vmatprep.subr.bf16.mxu0 0
    %583 = vmatpush1.bf16.msra.mxu0 %v539
    %584 = vmatprep.subr.bf16.mxu0 0
    %585 = vmatpush1.bf16.msra.mxu0 %v540
    %586 = vmatprep.mubr.bf16.mxu0 %v551
    %587 = vmatmul.mubr.bf16.gmra.mrb[0].mxu0 %v550
    %v588 = vpop.f32.mrb[0].mxu0
    %v589 = vadd.f32 %v545, %v588
    %v590 = vpop.f32.mrb[0].mxu0
    %v591 = vpop.f32.mrb[0].mxu0
    %v592 = vpop.f32.mrb[0].mxu0
    %593 = vdwg.mxu0
    %v594 = vrot.slane %v589, 4
    %v595 = vmax.f32 %v589, %v594
    %v596 = vrot.slane %v595, 2
    %v597 = vmax.f32 %v595, %v596
    %v598 = vrot.slane %v597, 1
    %v599 = vmax.f32 %v597, %v598
    %v600 = vsub.f32 %v589, %v599
    %v601 = vmul.f32 %v600, 1.442695
    %v602 = vpow.pop %v601
    %v603 = vrot.slane %v602, 4
    %v604 = vadd.f32 %v602, %v603
    %v605 = vrot.slane %v604, 2
    %v606 = vadd.f32 %v604, %v605
    %v607 = vrot.slane %v606, 1
    %v608 = vadd.f32 %v606, %v607
    %v609 = vlog2.pop %v608
    %v610 = vmul.f32 %v609, 0.6931472
    %v611 = vsub.f32 %v600, %v610
    %612 = vst [vmem:[#allocation5] sm:$0xff] %v611
    // Predicated region
    $region30: #{tpu_custom_call.1} parent=1 // pred_check
      _
    $region31: #{tpu_custom_call.1} parent=1 // pred_check_branch
      %614 = sbr.rel (0) target = $region33
    $region32: #{tpu_custom_call.1} parent=1 // pred_region
      %s616 = ssub.s32 128, 128
      %617 = vsyncadd [#allocation4], %s616
      %s619 = sshll.u32 [#allocation5], 4
      %s620 = int_to_ptr.vmem [resolvable:$true] %s619
      %622 = dma.vmem_to_hbm [thread:$0]  %s620, 128, %s6, [#allocation4]
    $region33: #{tpu_custom_call.1} parent=1 // pred_fallthru
      _
    // Predicated region
    $region34: #{tpu_custom_call.1} parent=1 // pred_check
      _
    $region35: #{tpu_custom_call.1} parent=1 // pred_check_branch
      %624 = sbr.rel (0) target = $region37
    $region36: #{tpu_custom_call.1} parent=1 // pred_region
      %625 = dma.done [#allocation4], 128
    $region37: #{tpu_custom_call.1} parent=1 // pred_fallthru
      _
    %626 = vsyncpa [#allocation3], 1
    %627 = vsyncpa [#allocation4], 1

</llo_original>
